<compile_context>
chip_gen: v6e
topology: v6e:2x2x1
jax: 0.10.0
libtpu: 0.0.40
codegen_flags: <defaults>
</compile_context>

<pallas_src>
import functools
import math

import jax
import jax.numpy as jnp
from jax.experimental import pallas as pl
from jax.experimental.pallas import tpu as pltpu

LN_EPS = 1e-5
LANE = 128


def _round_up(x, m):
    return ((x + m - 1) // m) * m


# ----------------------------------------------------------------------------
# Parameter construction (deterministic, PyTorch-default-style init)
# ----------------------------------------------------------------------------
def build_maml_module_params(key, y_channels, hidden, depth_enc):
    """Returns (dims, Ws, bs, gammas, betas) with true (unpadded) shapes.

    dims[l] -> dims[l+1] is linear layer l; LayerNorm j normalizes dims[j+1].
    """
    h4, h2 = hidden // 4, hidden // 2
    dims = [y_channels, h4, h2, hidden] + [hidden] * depth_enc + [y_channels]
    L = len(dims) - 1

    keys = jax.random.split(key, L)
    Ws, bs = [], []
    for l in range(L):
        fan_in, fan_out = dims[l], dims[l + 1]
        kw, kb = jax.random.split(keys[l])
        bound = 1.0 / math.sqrt(fan_in)
        # Stored pre-transposed as [in, out] so the kernel does x @ W.
        Ws.append(jax.random.uniform(kw, (fan_in, fan_out), jnp.float32,
                                     -bound, bound))
        bs.append(jax.random.uniform(kb, (fan_out,), jnp.float32,
                                     -bound, bound))
    gammas = [jnp.ones((dims[j + 1],), jnp.float32) for j in range(L - 1)]
    betas = [jnp.zeros((dims[j + 1],), jnp.float32) for j in range(L - 1)]
    return dims, Ws, bs, gammas, betas


def pack_params(dims, Ws, bs, gammas, betas):
    """Pack into a [L,128,128] bf16 weight stack and a [n_vec,128] f32 stack.

    Padded lanes/rows are zero so padded activation lanes stay exactly zero
    through every matmul / LayerNorm / ReLU.
    Vec layout: rows 0..L-1 = biases; rows L+2j / L+2j+1 = gamma_j / beta_j.
    """
    L = len(dims) - 1
    w_stack = jnp.zeros((L, LANE, LANE), jnp.float32)
    for l in range(L):
        w_stack = w_stack.at[l, :dims[l], :dims[l + 1]].set(Ws[l])
    w_stack = w_stack.astype(jnp.bfloat16)

    vec_rows = []
    for l in range(L):
        vec_rows.append(jnp.zeros((LANE,), jnp.float32).at[:dims[l + 1]].set(bs[l]))
    for j in range(L - 1):
        vec_rows.append(jnp.zeros((LANE,), jnp.float32).at[:dims[j + 1]].set(gammas[j]))
        vec_rows.append(jnp.zeros((LANE,), jnp.float32).at[:dims[j + 1]].set(betas[j]))
    v_stack = jnp.stack(vec_rows, axis=0)
    return w_stack, v_stack


# ----------------------------------------------------------------------------
# Pallas kernel: full MLP for one row tile; params resident in VMEM
# ----------------------------------------------------------------------------
def _mlp_kernel(dims, x_ref, w_ref, v_ref, o_ref):
    L = len(dims) - 1
    C = dims[0]
    V = v_ref[...]                            # [n_vec, 128] f32 (small, load once)

    def linear(x, l):
        w = w_ref[l]                          # [128, 128] bf16 (zero-padded)
        b = V[l][None, :]                     # [1, 128]  (zero-padded)
        return jnp.dot(x.astype(jnp.bfloat16), w,
                       preferred_element_type=jnp.float32) + b

    def layernorm(x, j, d):
        # Padded lanes of x are exactly zero, so unmasked s1/s2 are the true
        # feature-lane moments; gamma/beta zero-padding re-zeroes padded lanes.
        g = V[L + 2 * j][None, :]
        be = V[L + 2 * j + 1][None, :]
        inv_d = 1.0 / float(d)
        s1 = jnp.sum(x, axis=-1, keepdims=True)
        s2 = jnp.sum(x * x, axis=-1, keepdims=True)
        mu = s1 * inv_d
        var = s2 * inv_d - mu * mu
        return (x - mu) * (jax.lax.rsqrt(var + LN_EPS) * g) + be

    # Lane-pad the narrow input tile inside the kernel (no HBM slab outside).
    x_in = x_ref[...].astype(jnp.float32)                 # [tile, C]
    x = jnp.concatenate(
        [x_in, jnp.zeros((x_in.shape[0], LANE - C), jnp.float32)], axis=-1)

    x = linear(x, 0)
    for l in range(1, L):
        x = layernorm(x, l - 1, dims[l])
        x = jnp.maximum(x, 0.0)
        x = linear(x, l)
    o_ref[...] = x.astype(o_ref.dtype)        # bf16, lane-dense 128-wide store


# ----------------------------------------------------------------------------
# Host wrapper
# ----------------------------------------------------------------------------
def maml_forward(y, dims, w_stack, v_stack, *, tile_rows=1024):
    """Pallas implementation of MAML.forward(y, input_length): module(y)."""
    C = dims[0]
    L = len(dims) - 1
    lead = y.shape[:-1]
    n_rows = int(math.prod(lead)) if lead else 1
    y2d = y.reshape(n_rows, C)

    # Row tile: >=2 grid steps once the batch is non-trivial (v7x dual-TC),
    # multiples of 128 for large batches, one small full tile otherwise.
    if n_rows >= 256:
        tile = min(tile_rows, _round_up((n_rows + 1) // 2, 128))
    else:
        tile = _round_up(max(n_rows, 1), 16)
    n_pad = _round_up(n_rows, tile)

    # Row-pad only; keep the true channel width C (C == full last dim -> legal).
    y_rows = jnp.pad(y2d.astype(jnp.bfloat16), ((0, n_pad - n_rows), (0, 0)))

    n_vec = v_stack.shape[0]
    grid = (n_pad // tile,)

    flops = 2 * n_pad * L * LANE * LANE
    bytes_accessed = (n_pad * C * 2            # bf16 input (true width)
                      + n_pad * LANE * 2       # bf16 output
                      + L * LANE * LANE * 2    # bf16 weight stack
                      + n_vec * LANE * 4)      # f32 vec stack
    transcendentals = n_pad * (L - 1)          # one rsqrt per LN per row

    kernel = functools.partial(_mlp_kernel, tuple(dims))
    out_pad = pl.pallas_call(
        kernel,
        out_shape=jax.ShapeDtypeStruct((n_pad, LANE), jnp.bfloat16),
        grid=grid,
        in_specs=[
            pl.BlockSpec((tile, C), lambda i: (i, 0)),           # y rows (narrow)
            pl.BlockSpec((L, LANE, LANE), lambda i: (0, 0, 0)),  # weights (resident)
            pl.BlockSpec((n_vec, LANE), lambda i: (0, 0)),       # bias/gamma/beta
        ],
        out_specs=pl.BlockSpec((tile, LANE), lambda i: (i, 0)),
        compiler_params=pltpu.CompilerParams(
            dimension_semantics=("parallel",),
            vmem_limit_bytes=32 * 1024 * 1024,
        ),
        cost_estimate=pl.CostEstimate(
            flops=flops,
            transcendentals=transcendentals,
            bytes_accessed=bytes_accessed,
        ),
    )(y_rows, w_stack, v_stack)

    out = out_pad[:n_rows, :C].astype(jnp.float32)
    return out.reshape(*lead, C)


# ----------------------------------------------------------------------------
# Pure-JAX reference (same bf16 weight storage / f32 accumulation)
# ----------------------------------------------------------------------------
def maml_forward_ref(y, dims, Ws, bs, gammas, betas):
    L = len(dims) - 1
    Ws_bf16 = [w.astype(jnp.bfloat16) for w in Ws]
    x = y.astype(jnp.float32)

    def lin(x, l):
        return jnp.dot(x.astype(jnp.bfloat16), Ws_bf16[l],
                       preferred_element_type=jnp.float32) + bs[l]

    def ln(x, j):
        mu = jnp.mean(x, axis=-1, keepdims=True)
        var = jnp.mean((x - mu) ** 2, axis=-1, keepdims=True)
        return (x - mu) * jax.lax.rsqrt(var + LN_EPS) * gammas[j] + betas[j]

    x = lin(x, 0)
    for l in range(1, L):
        x = lin(jnp.maximum(ln(x, l - 1), 0.0), l)
    return x


if __name__ == "__main__":
    # Module hyperparameters (small, consistent with the PyTorch __init__)
    y_channels = 8
    dfunc_hidden_channels = 32
    depth_enc = 2
    num_envs = 3          # unused in forward
    lr = 0.1              # unused in forward
    input_length = 8      # unused in forward (kwarg in the PyTorch signature)

    key = jax.random.PRNGKey(0)
    kp, kx = jax.random.split(key)

    dims, Ws, bs, gammas, betas = build_maml_module_params(
        kp, y_channels, dfunc_hidden_channels, depth_enc)
    w_stack, v_stack = pack_params(dims, Ws, bs, gammas, betas)

    # y: [batch, seq, y_channels]
    y = jax.random.normal(kx, (2, 8, y_channels), jnp.float32)

    out = maml_forward(y, dims, w_stack, v_stack)
    out = jax.block_until_ready(out)

    ref = maml_forward_ref(y, dims, Ws, bs, gammas, betas)
    assert out.shape == (2, 8, y_channels)
    max_err = float(jnp.max(jnp.abs(out - ref)))
    assert jnp.allclose(out, ref, atol=5e-3, rtol=5e-3), max_err

    print("KERNEL_OK")
</pallas_src>

<mosaic_0001>
module attributes {stable_mosaic.version = 11 : i64} {
  func.func @_mlp_kernel(%arg0: i32, %arg1: memref<16x8xbf16, #tpu.memory_space<vmem>>, %arg2: memref<6x128x128xbf16, #tpu.memory_space<vmem>>, %arg3: memref<16x128xf32, #tpu.memory_space<vmem>>, %arg4: memref<16x128xbf16, #tpu.memory_space<vmem>>) attributes {dimension_semantics = [#tpu.dimension_semantics<parallel>], iteration_bounds = array<i64: 1>, scalar_prefetch = 0 : i64, scratch_operands = 0 : i64, tpu.core_type = #tpu.core_type<tc>, window_params = [{transform_indices = @transform_0, window_bounds = array<i64: 16, 8>}, {pipeline_mode = #tpu.pipeline_mode<synchronous>, transform_indices = @transform_1, window_bounds = array<i64: 6, 128, 128>}, {pipeline_mode = #tpu.pipeline_mode<synchronous>, transform_indices = @transform_2, window_bounds = array<i64: 16, 128>}, {transform_indices = @transform_3, window_bounds = array<i64: 16, 128>}]} {
    %c0 = arith.constant 0 : index
    %c0_0 = arith.constant 0 : index
    %0 = vector.load %arg3[%c0, %c0_0] : memref<16x128xf32, #tpu.memory_space<vmem>>, vector<16x128xf32>
    %c0_1 = arith.constant 0 : index
    %c0_2 = arith.constant 0 : index
    %1 = vector.load %arg1[%c0_1, %c0_2] : memref<16x8xbf16, #tpu.memory_space<vmem>>, vector<16x8xbf16>
    %2 = arith.extf %1 : vector<16x8xbf16> to vector<16x8xf32>
    %cst = arith.constant 0.000000e+00 : f32
    %3 = vector.broadcast %cst : f32 to vector<16x120xf32>
    %4 = tpu.concatenate %2, %3 in 1 : vector<16x8xf32>, vector<16x120xf32> -> vector<16x128xf32>
    %c0_3 = arith.constant 0 : index
    %c0_4 = arith.constant 0 : index
    %c0_5 = arith.constant 0 : index
    %5 = vector.load %arg2[%c0_3, %c0_4, %c0_5] : memref<6x128x128xbf16, #tpu.memory_space<vmem>>, vector<1x128x128xbf16>
    %6 = vector.shape_cast %5 : vector<1x128x128xbf16> to vector<128x128xbf16>
    %7 = vector.extract_strided_slice %0 {offsets = [0, 0], sizes = [1, 128], strides = [1, 1]} : vector<16x128xf32> to vector<1x128xf32>
    %8 = vector.shape_cast %7 : vector<1x128xf32> to vector<128xf32>
    %9 = vector.shape_cast %8 : vector<128xf32> to vector<1x128xf32>
    %10 = arith.truncf %4 : vector<16x128xf32> to vector<16x128xbf16>
    %cst_6 = arith.constant dense<0.000000e+00> : vector<16x128xf32>
    %11 = tpu.matmul %10, %6, %cst_6 {dimension_numbers = #tpu.dot_dimension_numbers<[1], [0], [0], [1], [0, 0, 1, 1], [], []>} : vector<16x128xbf16>, vector<128x128xbf16>, vector<16x128xf32> -> vector<16x128xf32>
    %12 = vector.broadcast %9 : vector<1x128xf32> to vector<16x128xf32>
    %13 = arith.addf %11, %12 : vector<16x128xf32>
    %14 = vector.extract_strided_slice %0 {offsets = [6, 0], sizes = [1, 128], strides = [1, 1]} : vector<16x128xf32> to vector<1x128xf32>
    %15 = vector.shape_cast %14 : vector<1x128xf32> to vector<128xf32>
    %16 = vector.shape_cast %15 : vector<128xf32> to vector<1x128xf32>
    %17 = vector.extract_strided_slice %0 {offsets = [7, 0], sizes = [1, 128], strides = [1, 1]} : vector<16x128xf32> to vector<1x128xf32>
    %18 = vector.shape_cast %17 : vector<1x128xf32> to vector<128xf32>
    %19 = vector.shape_cast %18 : vector<128xf32> to vector<1x128xf32>
    %cst_7 = arith.constant dense<0.000000e+00> : vector<16xf32>
    %20 = vector.multi_reduction <add>, %13, %cst_7 [1] : vector<16x128xf32> to vector<16xf32>
    %21 = vector.shape_cast %20 : vector<16xf32> to vector<16x1xf32>
    %22 = arith.mulf %13, %13 : vector<16x128xf32>
    %cst_8 = arith.constant dense<0.000000e+00> : vector<16xf32>
    %23 = vector.multi_reduction <add>, %22, %cst_8 [1] : vector<16x128xf32> to vector<16xf32>
    %24 = vector.shape_cast %23 : vector<16xf32> to vector<16x1xf32>
    %cst_9 = arith.constant 1.250000e-01 : f32
    %25 = vector.broadcast %cst_9 : f32 to vector<16x1xf32>
    %26 = arith.mulf %21, %25 : vector<16x1xf32>
    %cst_10 = arith.constant 1.250000e-01 : f32
    %27 = vector.broadcast %cst_10 : f32 to vector<16x1xf32>
    %28 = arith.mulf %24, %27 : vector<16x1xf32>
    %29 = arith.mulf %26, %26 : vector<16x1xf32>
    %30 = arith.subf %28, %29 : vector<16x1xf32>
    %31 = vector.broadcast %26 : vector<16x1xf32> to vector<16x128xf32>
    %32 = arith.subf %13, %31 : vector<16x128xf32>
    %cst_11 = arith.constant 9.99999974E-6 : f32
    %33 = vector.broadcast %cst_11 : f32 to vector<16x1xf32>
    %34 = arith.addf %30, %33 : vector<16x1xf32>
    %35 = math.rsqrt %34 : vector<16x1xf32>
    %36 = vector.broadcast %35 : vector<16x1xf32> to vector<16x128xf32>
    %37 = vector.broadcast %16 : vector<1x128xf32> to vector<16x128xf32>
    %38 = arith.mulf %36, %37 : vector<16x128xf32>
    %39 = arith.mulf %32, %38 : vector<16x128xf32>
    %40 = vector.broadcast %19 : vector<1x128xf32> to vector<16x128xf32>
    %41 = arith.addf %39, %40 : vector<16x128xf32>
    %cst_12 = arith.constant 0.000000e+00 : f32
    %42 = vector.broadcast %cst_12 : f32 to vector<16x128xf32>
    %43 = arith.maximumf %41, %42 : vector<16x128xf32>
    %c1 = arith.constant 1 : index
    %c0_13 = arith.constant 0 : index
    %c0_14 = arith.constant 0 : index
    %44 = vector.load %arg2[%c1, %c0_13, %c0_14] : memref<6x128x128xbf16, #tpu.memory_space<vmem>>, vector<1x128x128xbf16>
    %45 = vector.shape_cast %44 : vector<1x128x128xbf16> to vector<128x128xbf16>
    %46 = vector.extract_strided_slice %0 {offsets = [1, 0], sizes = [1, 128], strides = [1, 1]} : vector<16x128xf32> to vector<1x128xf32>
    %47 = vector.shape_cast %46 : vector<1x128xf32> to vector<128xf32>
    %48 = vector.shape_cast %47 : vector<128xf32> to vector<1x128xf32>
    %49 = arith.truncf %43 : vector<16x128xf32> to vector<16x128xbf16>
    %cst_15 = arith.constant dense<0.000000e+00> : vector<16x128xf32>
    %50 = tpu.matmul %49, %45, %cst_15 {dimension_numbers = #tpu.dot_dimension_numbers<[1], [0], [0], [1], [0, 0, 1, 1], [], []>} : vector<16x128xbf16>, vector<128x128xbf16>, vector<16x128xf32> -> vector<16x128xf32>
    %51 = vector.broadcast %48 : vector<1x128xf32> to vector<16x128xf32>
    %52 = arith.addf %50, %51 : vector<16x128xf32>
    %53 = vector.extract_strided_slice %0 {offsets = [8, 0], sizes = [1, 128], strides = [1, 1]} : vector<16x128xf32> to vector<1x128xf32>
    %54 = vector.shape_cast %53 : vector<1x128xf32> to vector<128xf32>
    %55 = vector.shape_cast %54 : vector<128xf32> to vector<1x128xf32>
    %56 = vector.extract_strided_slice %0 {offsets = [9, 0], sizes = [1, 128], strides = [1, 1]} : vector<16x128xf32> to vector<1x128xf32>
    %57 = vector.shape_cast %56 : vector<1x128xf32> to vector<128xf32>
    %58 = vector.shape_cast %57 : vector<128xf32> to vector<1x128xf32>
    %cst_16 = arith.constant dense<0.000000e+00> : vector<16xf32>
    %59 = vector.multi_reduction <add>, %52, %cst_16 [1] : vector<16x128xf32> to vector<16xf32>
    %60 = vector.shape_cast %59 : vector<16xf32> to vector<16x1xf32>
    %61 = arith.mulf %52, %52 : vector<16x128xf32>
    %cst_17 = arith.constant dense<0.000000e+00> : vector<16xf32>
    %62 = vector.multi_reduction <add>, %61, %cst_17 [1] : vector<16x128xf32> to vector<16xf32>
    %63 = vector.shape_cast %62 : vector<16xf32> to vector<16x1xf32>
    %cst_18 = arith.constant 6.250000e-02 : f32
    %64 = vector.broadcast %cst_18 : f32 to vector<16x1xf32>
    %65 = arith.mulf %60, %64 : vector<16x1xf32>
    %cst_19 = arith.constant 6.250000e-02 : f32
    %66 = vector.broadcast %cst_19 : f32 to vector<16x1xf32>
    %67 = arith.mulf %63, %66 : vector<16x1xf32>
    %68 = arith.mulf %65, %65 : vector<16x1xf32>
    %69 = arith.subf %67, %68 : vector<16x1xf32>
    %70 = vector.broadcast %65 : vector<16x1xf32> to vector<16x128xf32>
    %71 = arith.subf %52, %70 : vector<16x128xf32>
    %cst_20 = arith.constant 9.99999974E-6 : f32
    %72 = vector.broadcast %cst_20 : f32 to vector<16x1xf32>
    %73 = arith.addf %69, %72 : vector<16x1xf32>
    %74 = math.rsqrt %73 : vector<16x1xf32>
    %75 = vector.broadcast %74 : vector<16x1xf32> to vector<16x128xf32>
    %76 = vector.broadcast %55 : vector<1x128xf32> to vector<16x128xf32>
    %77 = arith.mulf %75, %76 : vector<16x128xf32>
    %78 = arith.mulf %71, %77 : vector<16x128xf32>
    %79 = vector.broadcast %58 : vector<1x128xf32> to vector<16x128xf32>
    %80 = arith.addf %78, %79 : vector<16x128xf32>
    %cst_21 = arith.constant 0.000000e+00 : f32
    %81 = vector.broadcast %cst_21 : f32 to vector<16x128xf32>
    %82 = arith.maximumf %80, %81 : vector<16x128xf32>
    %c2 = arith.constant 2 : index
    %c0_22 = arith.constant 0 : index
    %c0_23 = arith.constant 0 : index
    %83 = vector.load %arg2[%c2, %c0_22, %c0_23] : memref<6x128x128xbf16, #tpu.memory_space<vmem>>, vector<1x128x128xbf16>
    %84 = vector.shape_cast %83 : vector<1x128x128xbf16> to vector<128x128xbf16>
    %85 = vector.extract_strided_slice %0 {offsets = [2, 0], sizes = [1, 128], strides = [1, 1]} : vector<16x128xf32> to vector<1x128xf32>
    %86 = vector.shape_cast %85 : vector<1x128xf32> to vector<128xf32>
    %87 = vector.shape_cast %86 : vector<128xf32> to vector<1x128xf32>
    %88 = arith.truncf %82 : vector<16x128xf32> to vector<16x128xbf16>
    %cst_24 = arith.constant dense<0.000000e+00> : vector<16x128xf32>
    %89 = tpu.matmul %88, %84, %cst_24 {dimension_numbers = #tpu.dot_dimension_numbers<[1], [0], [0], [1], [0, 0, 1, 1], [], []>} : vector<16x128xbf16>, vector<128x128xbf16>, vector<16x128xf32> -> vector<16x128xf32>
    %90 = vector.broadcast %87 : vector<1x128xf32> to vector<16x128xf32>
    %91 = arith.addf %89, %90 : vector<16x128xf32>
    %92 = vector.extract_strided_slice %0 {offsets = [10, 0], sizes = [1, 128], strides = [1, 1]} : vector<16x128xf32> to vector<1x128xf32>
    %93 = vector.shape_cast %92 : vector<1x128xf32> to vector<128xf32>
    %94 = vector.shape_cast %93 : vector<128xf32> to vector<1x128xf32>
    %95 = vector.extract_strided_slice %0 {offsets = [11, 0], sizes = [1, 128], strides = [1, 1]} : vector<16x128xf32> to vector<1x128xf32>
    %96 = vector.shape_cast %95 : vector<1x128xf32> to vector<128xf32>
    %97 = vector.shape_cast %96 : vector<128xf32> to vector<1x128xf32>
    %cst_25 = arith.constant dense<0.000000e+00> : vector<16xf32>
    %98 = vector.multi_reduction <add>, %91, %cst_25 [1] : vector<16x128xf32> to vector<16xf32>
    %99 = vector.shape_cast %98 : vector<16xf32> to vector<16x1xf32>
    %100 = arith.mulf %91, %91 : vector<16x128xf32>
    %cst_26 = arith.constant dense<0.000000e+00> : vector<16xf32>
    %101 = vector.multi_reduction <add>, %100, %cst_26 [1] : vector<16x128xf32> to vector<16xf32>
    %102 = vector.shape_cast %101 : vector<16xf32> to vector<16x1xf32>
    %cst_27 = arith.constant 3.125000e-02 : f32
    %103 = vector.broadcast %cst_27 : f32 to vector<16x1xf32>
    %104 = arith.mulf %99, %103 : vector<16x1xf32>
    %cst_28 = arith.constant 3.125000e-02 : f32
    %105 = vector.broadcast %cst_28 : f32 to vector<16x1xf32>
    %106 = arith.mulf %102, %105 : vector<16x1xf32>
    %107 = arith.mulf %104, %104 : vector<16x1xf32>
    %108 = arith.subf %106, %107 : vector<16x1xf32>
    %109 = vector.broadcast %104 : vector<16x1xf32> to vector<16x128xf32>
    %110 = arith.subf %91, %109 : vector<16x128xf32>
    %cst_29 = arith.constant 9.99999974E-6 : f32
    %111 = vector.broadcast %cst_29 : f32 to vector<16x1xf32>
    %112 = arith.addf %108, %111 : vector<16x1xf32>
    %113 = math.rsqrt %112 : vector<16x1xf32>
    %114 = vector.broadcast %113 : vector<16x1xf32> to vector<16x128xf32>
    %115 = vector.broadcast %94 : vector<1x128xf32> to vector<16x128xf32>
    %116 = arith.mulf %114, %115 : vector<16x128xf32>
    %117 = arith.mulf %110, %116 : vector<16x128xf32>
    %118 = vector.broadcast %97 : vector<1x128xf32> to vector<16x128xf32>
    %119 = arith.addf %117, %118 : vector<16x128xf32>
    %cst_30 = arith.constant 0.000000e+00 : f32
    %120 = vector.broadcast %cst_30 : f32 to vector<16x128xf32>
    %121 = arith.maximumf %119, %120 : vector<16x128xf32>
    %c3 = arith.constant 3 : index
    %c0_31 = arith.constant 0 : index
    %c0_32 = arith.constant 0 : index
    %122 = vector.load %arg2[%c3, %c0_31, %c0_32] : memref<6x128x128xbf16, #tpu.memory_space<vmem>>, vector<1x128x128xbf16>
    %123 = vector.shape_cast %122 : vector<1x128x128xbf16> to vector<128x128xbf16>
    %124 = vector.extract_strided_slice %0 {offsets = [3, 0], sizes = [1, 128], strides = [1, 1]} : vector<16x128xf32> to vector<1x128xf32>
    %125 = vector.shape_cast %124 : vector<1x128xf32> to vector<128xf32>
    %126 = vector.shape_cast %125 : vector<128xf32> to vector<1x128xf32>
    %127 = arith.truncf %121 : vector<16x128xf32> to vector<16x128xbf16>
    %cst_33 = arith.constant dense<0.000000e+00> : vector<16x128xf32>
    %128 = tpu.matmul %127, %123, %cst_33 {dimension_numbers = #tpu.dot_dimension_numbers<[1], [0], [0], [1], [0, 0, 1, 1], [], []>} : vector<16x128xbf16>, vector<128x128xbf16>, vector<16x128xf32> -> vector<16x128xf32>
    %129 = vector.broadcast %126 : vector<1x128xf32> to vector<16x128xf32>
    %130 = arith.addf %128, %129 : vector<16x128xf32>
    %131 = vector.extract_strided_slice %0 {offsets = [12, 0], sizes = [1, 128], strides = [1, 1]} : vector<16x128xf32> to vector<1x128xf32>
    %132 = vector.shape_cast %131 : vector<1x128xf32> to vector<128xf32>
    %133 = vector.shape_cast %132 : vector<128xf32> to vector<1x128xf32>
    %134 = vector.extract_strided_slice %0 {offsets = [13, 0], sizes = [1, 128], strides = [1, 1]} : vector<16x128xf32> to vector<1x128xf32>
    %135 = vector.shape_cast %134 : vector<1x128xf32> to vector<128xf32>
    %136 = vector.shape_cast %135 : vector<128xf32> to vector<1x128xf32>
    %cst_34 = arith.constant dense<0.000000e+00> : vector<16xf32>
    %137 = vector.multi_reduction <add>, %130, %cst_34 [1] : vector<16x128xf32> to vector<16xf32>
    %138 = vector.shape_cast %137 : vector<16xf32> to vector<16x1xf32>
    %139 = arith.mulf %130, %130 : vector<16x128xf32>
    %cst_35 = arith.constant dense<0.000000e+00> : vector<16xf32>
    %140 = vector.multi_reduction <add>, %139, %cst_35 [1] : vector<16x128xf32> to vector<16xf32>
    %141 = vector.shape_cast %140 : vector<16xf32> to vector<16x1xf32>
    %cst_36 = arith.constant 3.125000e-02 : f32
    %142 = vector.broadcast %cst_36 : f32 to vector<16x1xf32>
    %143 = arith.mulf %138, %142 : vector<16x1xf32>
    %cst_37 = arith.constant 3.125000e-02 : f32
    %144 = vector.broadcast %cst_37 : f32 to vector<16x1xf32>
    %145 = arith.mulf %141, %144 : vector<16x1xf32>
    %146 = arith.mulf %143, %143 : vector<16x1xf32>
    %147 = arith.subf %145, %146 : vector<16x1xf32>
    %148 = vector.broadcast %143 : vector<16x1xf32> to vector<16x128xf32>
    %149 = arith.subf %130, %148 : vector<16x128xf32>
    %cst_38 = arith.constant 9.99999974E-6 : f32
    %150 = vector.broadcast %cst_38 : f32 to vector<16x1xf32>
    %151 = arith.addf %147, %150 : vector<16x1xf32>
    %152 = math.rsqrt %151 : vector<16x1xf32>
    %153 = vector.broadcast %152 : vector<16x1xf32> to vector<16x128xf32>
    %154 = vector.broadcast %133 : vector<1x128xf32> to vector<16x128xf32>
    %155 = arith.mulf %153, %154 : vector<16x128xf32>
    %156 = arith.mulf %149, %155 : vector<16x128xf32>
    %157 = vector.broadcast %136 : vector<1x128xf32> to vector<16x128xf32>
    %158 = arith.addf %156, %157 : vector<16x128xf32>
    %cst_39 = arith.constant 0.000000e+00 : f32
    %159 = vector.broadcast %cst_39 : f32 to vector<16x128xf32>
    %160 = arith.maximumf %158, %159 : vector<16x128xf32>
    %c4 = arith.constant 4 : index
    %c0_40 = arith.constant 0 : index
    %c0_41 = arith.constant 0 : index
    %161 = vector.load %arg2[%c4, %c0_40, %c0_41] : memref<6x128x128xbf16, #tpu.memory_space<vmem>>, vector<1x128x128xbf16>
    %162 = vector.shape_cast %161 : vector<1x128x128xbf16> to vector<128x128xbf16>
    %163 = vector.extract_strided_slice %0 {offsets = [4, 0], sizes = [1, 128], strides = [1, 1]} : vector<16x128xf32> to vector<1x128xf32>
    %164 = vector.shape_cast %163 : vector<1x128xf32> to vector<128xf32>
    %165 = vector.shape_cast %164 : vector<128xf32> to vector<1x128xf32>
    %166 = arith.truncf %160 : vector<16x128xf32> to vector<16x128xbf16>
    %cst_42 = arith.constant dense<0.000000e+00> : vector<16x128xf32>
    %167 = tpu.matmul %166, %162, %cst_42 {dimension_numbers = #tpu.dot_dimension_numbers<[1], [0], [0], [1], [0, 0, 1, 1], [], []>} : vector<16x128xbf16>, vector<128x128xbf16>, vector<16x128xf32> -> vector<16x128xf32>
    %168 = vector.broadcast %165 : vector<1x128xf32> to vector<16x128xf32>
    %169 = arith.addf %167, %168 : vector<16x128xf32>
    %170 = vector.extract_strided_slice %0 {offsets = [14, 0], sizes = [1, 128], strides = [1, 1]} : vector<16x128xf32> to vector<1x128xf32>
    %171 = vector.shape_cast %170 : vector<1x128xf32> to vector<128xf32>
    %172 = vector.shape_cast %171 : vector<128xf32> to vector<1x128xf32>
    %173 = vector.extract_strided_slice %0 {offsets = [15, 0], sizes = [1, 128], strides = [1, 1]} : vector<16x128xf32> to vector<1x128xf32>
    %174 = vector.shape_cast %173 : vector<1x128xf32> to vector<128xf32>
    %175 = vector.shape_cast %174 : vector<128xf32> to vector<1x128xf32>
    %cst_43 = arith.constant dense<0.000000e+00> : vector<16xf32>
    %176 = vector.multi_reduction <add>, %169, %cst_43 [1] : vector<16x128xf32> to vector<16xf32>
    %177 = vector.shape_cast %176 : vector<16xf32> to vector<16x1xf32>
    %178 = arith.mulf %169, %169 : vector<16x128xf32>
    %cst_44 = arith.constant dense<0.000000e+00> : vector<16xf32>
    %179 = vector.multi_reduction <add>, %178, %cst_44 [1] : vector<16x128xf32> to vector<16xf32>
    %180 = vector.shape_cast %179 : vector<16xf32> to vector<16x1xf32>
    %cst_45 = arith.constant 3.125000e-02 : f32
    %181 = vector.broadcast %cst_45 : f32 to vector<16x1xf32>
    %182 = arith.mulf %177, %181 : vector<16x1xf32>
    %cst_46 = arith.constant 3.125000e-02 : f32
    %183 = vector.broadcast %cst_46 : f32 to vector<16x1xf32>
    %184 = arith.mulf %180, %183 : vector<16x1xf32>
    %185 = arith.mulf %182, %182 : vector<16x1xf32>
    %186 = arith.subf %184, %185 : vector<16x1xf32>
    %187 = vector.broadcast %182 : vector<16x1xf32> to vector<16x128xf32>
    %188 = arith.subf %169, %187 : vector<16x128xf32>
    %cst_47 = arith.constant 9.99999974E-6 : f32
    %189 = vector.broadcast %cst_47 : f32 to vector<16x1xf32>
    %190 = arith.addf %186, %189 : vector<16x1xf32>
    %191 = math.rsqrt %190 : vector<16x1xf32>
    %192 = vector.broadcast %191 : vector<16x1xf32> to vector<16x128xf32>
    %193 = vector.broadcast %172 : vector<1x128xf32> to vector<16x128xf32>
    %194 = arith.mulf %192, %193 : vector<16x128xf32>
    %195 = arith.mulf %188, %194 : vector<16x128xf32>
    %196 = vector.broadcast %175 : vector<1x128xf32> to vector<16x128xf32>
    %197 = arith.addf %195, %196 : vector<16x128xf32>
    %cst_48 = arith.constant 0.000000e+00 : f32
    %198 = vector.broadcast %cst_48 : f32 to vector<16x128xf32>
    %199 = arith.maximumf %197, %198 : vector<16x128xf32>
    %c5 = arith.constant 5 : index
    %c0_49 = arith.constant 0 : index
    %c0_50 = arith.constant 0 : index
    %200 = vector.load %arg2[%c5, %c0_49, %c0_50] : memref<6x128x128xbf16, #tpu.memory_space<vmem>>, vector<1x128x128xbf16>
    %201 = vector.shape_cast %200 : vector<1x128x128xbf16> to vector<128x128xbf16>
    %202 = vector.extract_strided_slice %0 {offsets = [5, 0], sizes = [1, 128], strides = [1, 1]} : vector<16x128xf32> to vector<1x128xf32>
    %203 = vector.shape_cast %202 : vector<1x128xf32> to vector<128xf32>
    %204 = vector.shape_cast %203 : vector<128xf32> to vector<1x128xf32>
    %205 = arith.truncf %199 : vector<16x128xf32> to vector<16x128xbf16>
    %cst_51 = arith.constant dense<0.000000e+00> : vector<16x128xf32>
    %206 = tpu.matmul %205, %201, %cst_51 {dimension_numbers = #tpu.dot_dimension_numbers<[1], [0], [0], [1], [0, 0, 1, 1], [], []>} : vector<16x128xbf16>, vector<128x128xbf16>, vector<16x128xf32> -> vector<16x128xf32>
    %207 = vector.broadcast %204 : vector<1x128xf32> to vector<16x128xf32>
    %208 = arith.addf %206, %207 : vector<16x128xf32>
    %209 = arith.truncf %208 : vector<16x128xf32> to vector<16x128xbf16>
    %c0_52 = arith.constant 0 : index
    %c0_53 = arith.constant 0 : index
    %210 = vector.load %arg4[%c0_52, %c0_53] : memref<16x128xbf16, #tpu.memory_space<vmem>>, vector<16x128xbf16>
    tpu.vector_store %arg4[%c0_52, %c0_53], %209 {strides = array<i32>} : memref<16x128xbf16, #tpu.memory_space<vmem>>, vector<16x128xbf16>,
    return
  }
  func.func @transform_0(%arg0: i32) -> (i32, i32) {
    %c0_i32 = arith.constant 0 : i32
    %c0_i32_0 = arith.constant 0 : i32
    return %arg0, %c0_i32 : i32, i32
  }
  func.func @transform_1(%arg0: i32) -> (i32, i32, i32) {
    %c0_i32 = arith.constant 0 : i32
    %c0_i32_0 = arith.constant 0 : i32
    %c0_i32_1 = arith.constant 0 : i32
    %c0_i32_2 = arith.constant 0 : i32
    return %c0_i32, %c0_i32_0, %c0_i32_1 : i32, i32, i32
  }
  func.func @transform_2(%arg0: i32) -> (i32, i32) {
    %c0_i32 = arith.constant 0 : i32
    %c0_i32_0 = arith.constant 0 : i32
    %c0_i32_1 = arith.constant 0 : i32
    return %c0_i32, %c0_i32_0 : i32, i32
  }
  func.func @transform_3(%arg0: i32) -> (i32, i32) {
    %c0_i32 = arith.constant 0 : i32
    %c0_i32_0 = arith.constant 0 : i32
    return %arg0, %c0_i32 : i32, i32
  }
}

</mosaic_0001>

<llo_original>
// kernel: tpu_custom_call.1
$region0: #{tpu_custom_call.1}
  #allocation0 [shape = 'u32[]', space=smem, size = 0x4, offset = 0x4, fixed_abs, tag = 'smem constant byte address 0x4 - core index']
  #allocation1 [shape = 'u32[144,128]{1,0:T(1,128)}', space=vmem, size = 0x12000, scoped, tag = 'internal scratch']
  %s0 = inlined_call_operand.vmem [shape: bf16[16,8], index: 0, kind: input, shape index: {}]
  %s1 = inlined_call_operand.hbm [shape: bf16[6,128,128], index: 1, kind: input, shape index: {}]
  %s2 = inlined_call_operand.hbm [shape: f32[16,128], index: 2, kind: input, shape index: {}]
  %s3 = inlined_call_operand.hbm [shape: bf16[16,128], index: 3, kind: output, shape index: {}]
  %s4 = sld [smem:[#allocation0]]
  $region30: #{tpu_custom_call.1} parent=0
    _
  %s6 = ssub.s32 1, %s4
  %s7 = scalar_select 0, %s6, %s4
  $region1: #{tpu_custom_call.1} parent=0
    #allocation2 [shape = 'u8[196608]{0}', space=vmem, size = 0x30000, scoped, tag = 'input window, operand 1, single buffered']
    #allocation3 [shape = 's32[1]{0}', space=sflag, size = 0x4, scoped, tag = 'scoped memory for tpu_custom_call.1']
    #allocation4 [shape = 's32[1]{0}', space=sflag, size = 0x4, scoped, tag = 'scoped memory for tpu_custom_call.1']
    #allocation5 [shape = 'u8[8192]{0}', space=vmem, size = 0x2000, scoped, tag = 'input window, operand 2, single buffered']
    #allocation6 [shape = 's32[1]{0}', space=sflag, size = 0x4, scoped, tag = 'scoped memory for tpu_custom_call.1']
    #allocation7 [shape = 'u8[4096]{0}', space=vmem, size = 0x1000, scoped, tag = 'output window, operand 0, single buffered']
    %8 = vsyncpa [#allocation3], 0
    %9 = vsyncpa [#allocation6], 0
    %10 = vsyncpa [#allocation4], 0
    // Predicated region
    $region2: #{tpu_custom_call.1} parent=1 // pred_check
      _
    $region3: #{tpu_custom_call.1} parent=1 // pred_check_branch
      %12 = sbr.rel (0) target = $region5
    $region4: #{tpu_custom_call.1} parent=1 // pred_region
      _
    $region5: #{tpu_custom_call.1} parent=1 // pred_fallthru
      _
    // Predicated region
    $region6: #{tpu_custom_call.1} parent=1 // pred_check
      _
    $region7: #{tpu_custom_call.1} parent=1 // pred_check_branch
      %14 = sbr.rel (0) target = $region9
    $region8: #{tpu_custom_call.1} parent=1 // pred_region
      %s16 = ssub.s32 6144, 6144
      %17 = vsyncadd [#allocation3], %s16
      %s18 = sshll.u32 [#allocation2], 4
      %s19 = int_to_ptr.vmem [resolvable:$true] %s18
      %24 = dma.hbm_to_vmem [thread:$0]  %s1, 6144, %s19, [#allocation3], 64, 64, 4
    $region9: #{tpu_custom_call.1} parent=1 // pred_fallthru
      _
    // Predicated region
    $region10: #{tpu_custom_call.1} parent=1 // pred_check
      _
    $region11: #{tpu_custom_call.1} parent=1 // pred_check_branch
      %26 = sbr.rel (0) target = $region13
    $region12: #{tpu_custom_call.1} parent=1 // pred_region
      %s28 = ssub.s32 256, 256
      %29 = vsyncadd [#allocation6], %s28
      %s30 = sshll.u32 [#allocation5], 4
      %s31 = int_to_ptr.vmem [resolvable:$true] %s30
      %36 = dma.hbm_to_vmem [thread:$0]  %s2, 256, %s31, [#allocation6], 128, 128, 8
    $region13: #{tpu_custom_call.1} parent=1 // pred_fallthru
      _
    // Predicated region
    $region14: #{tpu_custom_call.1} parent=1 // pred_check
      _
    $region15: #{tpu_custom_call.1} parent=1 // pred_check_branch
      %38 = sbr.rel (0) target = $region17
    $region16: #{tpu_custom_call.1} parent=1 // pred_region
      %39 = dma.done [#allocation3], 6144
    $region17: #{tpu_custom_call.1} parent=1 // pred_fallthru
      _
    // Predicated region
    $region18: #{tpu_custom_call.1} parent=1 // pred_check
      _
    $region19: #{tpu_custom_call.1} parent=1 // pred_check_branch
      %41 = sbr.rel (0) target = $region21
    $region20: #{tpu_custom_call.1} parent=1 // pred_region
      %42 = dma.done [#allocation6], 256
    $region21: #{tpu_custom_call.1} parent=1 // pred_fallthru
      _
    %v44 = vld [vmem:[#allocation5] sm:$0xff]
    %v45 = vld [vmem:[#allocation5 + $0x8] sm:$0xff]
    %v46 = vld [vmem:[%s0] sm:$0xf]
    %v47 = vld [vmem:[%s0 + $0x4] sm:$0xf]
    %v48 = vunpack.c.l.bf16 %v46
    %v49 = vunpack.c.l.bf16 %v47
    %vm50 = vcmask 64512
    %v51 = vsel %vm50, %v48, 0.0
    %v52 = vsel %vm50, %v49, 0.0
    %v53 = vld [vmem:[#allocation2] sm:$0xf]
    %v54 = vld [vmem:[#allocation2 + $0x4] sm:$0xf]
    %v55 = vld [vmem:[#allocation2 + $0x8] sm:$0xf]
    %v56 = vld [vmem:[#allocation2 + $0xc] sm:$0xf]
    %v57 = vld [vmem:[#allocation2 + $0x10] sm:$0xf]
    %v58 = vld [vmem:[#allocation2 + $0x14] sm:$0xf]
    %v59 = vld [vmem:[#allocation2 + $0x18] sm:$0xf]
    %v60 = vld [vmem:[#allocation2 + $0x1c] sm:$0xf]
    %v61 = vld [vmem:[#allocation2 + $0x20] sm:$0xf]
    %v62 = vld [vmem:[#allocation2 + $0x24] sm:$0xf]
    %v63 = vld [vmem:[#allocation2 + $0x28] sm:$0xf]
    %v64 = vld [vmem:[#allocation2 + $0x2c] sm:$0xf]
    %v65 = vld [vmem:[#allocation2 + $0x30] sm:$0xf]
    %v66 = vld [vmem:[#allocation2 + $0x34] sm:$0xf]
    %v67 = vld [vmem:[#allocation2 + $0x38] sm:$0xf]
    %v68 = vld [vmem:[#allocation2 + $0x3c] sm:$0xf]
    %v69 = vpack.c.bf16 %v52, %v51
    %v70 = vlaneseq
    %v71 = vshrl.u32 %v70, 7
    %v72 = vsub.s32 0, %v71
    %v73 = vrot.slane %v44, %v72
    %v90 = vunpack.c.l.b16 %v53
    %v91 = vunpack.c.l.b16 %v54
    %v92 = vunpack.c.l.b16 %v55
    %v93 = vunpack.c.l.b16 %v56
    %v94 = vunpack.c.l.b16 %v57
    %v95 = vunpack.c.l.b16 %v58
    %v96 = vunpack.c.l.b16 %v59
    %v97 = vunpack.c.l.b16 %v60
    %v98 = vunpack.c.l.b16 %v61
    %v99 = vunpack.c.l.b16 %v62
    %v100 = vunpack.c.l.b16 %v63
    %v101 = vunpack.c.l.b16 %v64
    %v102 = vunpack.c.l.b16 %v65
    %v103 = vunpack.c.l.b16 %v66
    %v104 = vunpack.c.l.b16 %v67
    %v105 = vunpack.c.l.b16 %v68
    %v106 = vpack.c.b16 %v91, %v90
    %v107 = vpack.c.b16 %v93, %v92
    %v108 = vpack.c.b16 %v95, %v94
    %v109 = vpack.c.b16 %v97, %v96
    %v110 = vpack.c.b16 %v99, %v98
    %v111 = vpack.c.b16 %v101, %v100
    %v112 = vpack.c.b16 %v103, %v102
    %v113 = vpack.c.b16 %v105, %v104
    %122 = vmatprep.subr.bf16.mxu0 0
    %123 = vmatpush1.bf16.msra.mxu0 %v113
    %124 = vmatprep.subr.bf16.mxu0 0
    %125 = vmatpush1.bf16.msra.mxu0 %v112
    %126 = vmatprep.subr.bf16.mxu0 0
    %127 = vmatpush1.bf16.msra.mxu0 %v111
    %128 = vmatprep.subr.bf16.mxu0 0
    %129 = vmatpush1.bf16.msra.mxu0 %v110
    %130 = vmatprep.subr.bf16.mxu0 0
    %131 = vmatpush1.bf16.msra.mxu0 %v109
    %132 = vmatprep.subr.bf16.mxu0 0
    %133 = vmatpush1.bf16.msra.mxu0 %v108
    %134 = vmatprep.subr.bf16.mxu0 0
    %135 = vmatpush1.bf16.msra.mxu0 %v107
    %136 = vmatprep.subr.bf16.mxu0 0
    %137 = vmatpush1.bf16.msra.mxu0 %v106
    %138 = vmatprep.subr.bf16.mxu0 0
    %139 = vmatpush2.bf16.msra.mxu0 0
    %140 = vmatprep.subr.bf16.mxu0 0
    %141 = vmatpush2.bf16.msra.mxu0 0
    %142 = vmatprep.subr.bf16.mxu0 0
    %143 = vmatpush2.bf16.msra.mxu0 0
    %144 = vmatprep.subr.bf16.mxu0 0
    %145 = vmatpush2.bf16.msra.mxu0 0
    %146 = vmatprep.subr.bf16.mxu0 0
    %147 = vmatpush2.bf16.msra.mxu0 0
    %148 = vmatprep.subr.bf16.mxu0 0
    %149 = vmatpush2.bf16.msra.mxu0 0
    %150 = vmatprep.subr.bf16.mxu0 0
    %151 = vmatpush2.bf16.msra.mxu0 0
    %152 = vmatprep.subr.bf16.mxu0 0
    %153 = vmatpush2.bf16.msra.mxu0 0
    %154 = vmatprep.mubr.bf16.mxu0 0
    %155 = vmatmul.mubr.bf16.gmra.mxu0 %v69
    %v156 = vpop.f32.mrf.mxu0
    %v157 = vadd.f32 %v73, %v156
    %v158 = vpop.f32.mrf.mxu0
    %v159 = vpop.f32.mrf.mxu0
    %v160 = vadd.f32 %v73, %v159
    %v161 = vpop.f32.mrf.mxu0
    %162 = vdwg.mxu0
    %163 = vadd.xlane.f32.xlu0 %v157
    %v164 = vpop.xlane.xlu0 %163
    %165 = vadd.xlane.f32.xlu0 %v160
    %v166 = vpop.xlane.xlu0 %165
    %v167 = vmul.f32 %v157, %v157
    %v168 = vmul.f32 %v160, %v160
    %169 = vadd.xlane.f32.xlu0 %v167
    %v170 = vpop.xlane.xlu0 %169
    %171 = vadd.xlane.f32.xlu0 %v168
    %v172 = vpop.xlane.xlu0 %171
    %v173 = vmul.f32 %v164, 0.125
    %v174 = vmul.f32 %v166, 0.125
    %v175 = vmul.f32 %v170, 0.125
    %v176 = vmul.f32 %v172, 0.125
    %v177 = vmul.f32 %v173, %v173
    %v178 = vmul.f32 %v174, %v174
    %v179 = vsub.f32 %v175, %v177
    %v180 = vsub.f32 %v176, %v178
    %v181 = vsub.f32 %v157, %v173
    %v182 = vsub.f32 %v160, %v174
    %v183 = vadd.f32 %v179, 1e-05
    %v184 = vadd.f32 %v180, 1e-05
    %v185 = vrsqrt.pop %v183
    %v186 = vrsqrt.pop %v184
    %v187 = vlaneseq
    %v188 = vshrl.u32 %v187, 7
    %v189 = vsub.s32 6, %v188
    %v190 = vrot.slane %v44, %v189
    %v191 = vmul.f32 %v185, %v190
    %v192 = vmul.f32 %v186, %v190
    %v193 = vmul.f32 %v181, %v191
    %v194 = vmul.f32 %v182, %v192
    %v195 = vlaneseq
    %v196 = vshrl.u32 %v195, 7
    %v197 = vsub.s32 7, %v196
    %v198 = vrot.slane %v44, %v197
    %v199 = vadd.f32 %v193, %v198
    %v200 = vadd.f32 %v194, %v198
    %v201 = vmax.f32 %v199, 0.0
    %v202 = vmax.f32 %v200, 0.0
    %s203 = scalar_lea.vmem [#allocation2], 64
    %v204 = vld [vmem:[%s203] sm:$0xf]
    %v205 = vld [vmem:[%s203 + $0x4] sm:$0xf]
    %v206 = vld [vmem:[%s203 + $0x8] sm:$0xf]
    %v207 = vld [vmem:[%s203 + $0xc] sm:$0xf]
    %v208 = vld [vmem:[%s203 + $0x10] sm:$0xf]
    %v209 = vld [vmem:[%s203 + $0x14] sm:$0xf]
    %v210 = vld [vmem:[%s203 + $0x18] sm:$0xf]
    %v211 = vld [vmem:[%s203 + $0x1c] sm:$0xf]
    %v212 = vld [vmem:[%s203 + $0x20] sm:$0xf]
    %v213 = vld [vmem:[%s203 + $0x24] sm:$0xf]
    %v214 = vld [vmem:[%s203 + $0x28] sm:$0xf]
    %v215 = vld [vmem:[%s203 + $0x2c] sm:$0xf]
    %v216 = vld [vmem:[%s203 + $0x30] sm:$0xf]
    %v217 = vld [vmem:[%s203 + $0x34] sm:$0xf]
    %v218 = vld [vmem:[%s203 + $0x38] sm:$0xf]
    %v219 = vld [vmem:[%s203 + $0x3c] sm:$0xf]
    %v220 = vpack.c.bf16 %v202, %v201
    %v221 = vlaneseq
    %v222 = vshrl.u32 %v221, 7
    %v223 = vsub.s32 1, %v222
    %v224 = vrot.slane %v44, %v223
    %v241 = vunpack.c.l.b16 %v204
    %v242 = vunpack.c.l.b16 %v205
    %v243 = vunpack.c.l.b16 %v206
    %v244 = vunpack.c.l.b16 %v207
    %v245 = vunpack.c.l.b16 %v208
    %v246 = vunpack.c.l.b16 %v209
    %v247 = vunpack.c.l.b16 %v210
    %v248 = vunpack.c.l.b16 %v211
    %v249 = vunpack.c.l.b16 %v212
    %v250 = vunpack.c.l.b16 %v213
    %v251 = vunpack.c.l.b16 %v214
    %v252 = vunpack.c.l.b16 %v215
    %v253 = vunpack.c.l.b16 %v216
    %v254 = vunpack.c.l.b16 %v217
    %v255 = vunpack.c.l.b16 %v218
    %v256 = vunpack.c.l.b16 %v219
    %v257 = vpack.c.b16 %v242, %v241
    %v258 = vpack.c.b16 %v244, %v243
    %v259 = vpack.c.b16 %v246, %v245
    %v260 = vpack.c.b16 %v248, %v247
    %v261 = vpack.c.b16 %v250, %v249
    %v262 = vpack.c.b16 %v252, %v251
    %v263 = vpack.c.b16 %v254, %v253
    %v264 = vpack.c.b16 %v256, %v255
    %273 = vmatprep.subr.bf16.mxu0 0
    %274 = vmatpush1.bf16.msra.mxu0 %v264
    %275 = vmatprep.subr.bf16.mxu0 0
    %276 = vmatpush1.bf16.msra.mxu0 %v263
    %277 = vmatprep.subr.bf16.mxu0 0
    %278 = vmatpush1.bf16.msra.mxu0 %v262
    %279 = vmatprep.subr.bf16.mxu0 0
    %280 = vmatpush1.bf16.msra.mxu0 %v261
    %281 = vmatprep.subr.bf16.mxu0 0
    %282 = vmatpush1.bf16.msra.mxu0 %v260
    %283 = vmatprep.subr.bf16.mxu0 0
    %284 = vmatpush1.bf16.msra.mxu0 %v259
    %285 = vmatprep.subr.bf16.mxu0 0
    %286 = vmatpush1.bf16.msra.mxu0 %v258
    %287 = vmatprep.subr.bf16.mxu0 0
    %288 = vmatpush1.bf16.msra.mxu0 %v257
    %289 = vmatprep.subr.bf16.mxu0 0
    %290 = vmatpush2.bf16.msra.mxu0 0
    %291 = vmatprep.subr.bf16.mxu0 0
    %292 = vmatpush2.bf16.msra.mxu0 0
    %293 = vmatprep.subr.bf16.mxu0 0
    %294 = vmatpush2.bf16.msra.mxu0 0
    %295 = vmatprep.subr.bf16.mxu0 0
    %296 = vmatpush2.bf16.msra.mxu0 0
    %297 = vmatprep.subr.bf16.mxu0 0
    %298 = vmatpush2.bf16.msra.mxu0 0
    %299 = vmatprep.subr.bf16.mxu0 0
    %300 = vmatpush2.bf16.msra.mxu0 0
    %301 = vmatprep.subr.bf16.mxu0 0
    %302 = vmatpush2.bf16.msra.mxu0 0
    %303 = vmatprep.subr.bf16.mxu0 0
    %304 = vmatpush2.bf16.msra.mxu0 0
    %305 = vmatprep.mubr.bf16.mxu0 0
    %306 = vmatmul.mubr.bf16.gmra.mxu0 %v220
    %v307 = vpop.f32.mrf.mxu0
    %v308 = vadd.f32 %v224, %v307
    %v309 = vpop.f32.mrf.mxu0
    %v310 = vpop.f32.mrf.mxu0
    %v311 = vadd.f32 %v224, %v310
    %v312 = vpop.f32.mrf.mxu0
    %313 = vdwg.mxu0
    %314 = vadd.xlane.f32.xlu0 %v308
    %v315 = vpop.xlane.xlu0 %314
    %316 = vadd.xlane.f32.xlu0 %v311
    %v317 = vpop.xlane.xlu0 %316
    %v318 = vmul.f32 %v308, %v308
    %v319 = vmul.f32 %v311, %v311
    %320 = vadd.xlane.f32.xlu0 %v318
    %v321 = vpop.xlane.xlu0 %320
    %322 = vadd.xlane.f32.xlu0 %v319
    %v323 = vpop.xlane.xlu0 %322
    %v324 = vmul.f32 %v315, 0.0625
    %v325 = vmul.f32 %v317, 0.0625
    %v326 = vmul.f32 %v321, 0.0625
    %v327 = vmul.f32 %v323, 0.0625
    %v328 = vmul.f32 %v324, %v324
    %v329 = vmul.f32 %v325, %v325
    %v330 = vsub.f32 %v326, %v328
    %v331 = vsub.f32 %v327, %v329
    %v332 = vsub.f32 %v308, %v324
    %v333 = vsub.f32 %v311, %v325
    %v334 = vadd.f32 %v330, 1e-05
    %v335 = vadd.f32 %v331, 1e-05
    %v336 = vrsqrt.pop %v334
    %v337 = vrsqrt.pop %v335
    %v338 = vlaneseq
    %v339 = vshrl.u32 %v338, 7
    %v340 = vsub.s32 0, %v339
    %v341 = vrot.slane %v45, %v340
    %v342 = vmul.f32 %v336, %v341
    %v343 = vmul.f32 %v337, %v341
    %v344 = vmul.f32 %v332, %v342
    %v345 = vmul.f32 %v333, %v343
    %v346 = vlaneseq
    %v347 = vshrl.u32 %v346, 7
    %v348 = vsub.s32 1, %v347
    %v349 = vrot.slane %v45, %v348
    %v350 = vadd.f32 %v344, %v349
    %v351 = vadd.f32 %v345, %v349
    %v352 = vmax.f32 %v350, 0.0
    %v353 = vmax.f32 %v351, 0.0
    %s354 = scalar_lea.vmem [#allocation2], 128
    %v355 = vld [vmem:[%s354] sm:$0xf]
    %v356 = vld [vmem:[%s354 + $0x4] sm:$0xf]
    %v357 = vld [vmem:[%s354 + $0x8] sm:$0xf]
    %v358 = vld [vmem:[%s354 + $0xc] sm:$0xf]
    %v359 = vld [vmem:[%s354 + $0x10] sm:$0xf]
    %v360 = vld [vmem:[%s354 + $0x14] sm:$0xf]
    %v361 = vld [vmem:[%s354 + $0x18] sm:$0xf]
    %v362 = vld [vmem:[%s354 + $0x1c] sm:$0xf]
    %v363 = vld [vmem:[%s354 + $0x20] sm:$0xf]
    %v364 = vld [vmem:[%s354 + $0x24] sm:$0xf]
    %v365 = vld [vmem:[%s354 + $0x28] sm:$0xf]
    %v366 = vld [vmem:[%s354 + $0x2c] sm:$0xf]
    %v367 = vld [vmem:[%s354 + $0x30] sm:$0xf]
    %v368 = vld [vmem:[%s354 + $0x34] sm:$0xf]
    %v369 = vld [vmem:[%s354 + $0x38] sm:$0xf]
    %v370 = vld [vmem:[%s354 + $0x3c] sm:$0xf]
    %v371 = vpack.c.bf16 %v353, %v352
    %v372 = vlaneseq
    %v373 = vshrl.u32 %v372, 7
    %v374 = vsub.s32 2, %v373
    %v375 = vrot.slane %v44, %v374
    %v392 = vunpack.c.l.b16 %v355
    %v393 = vunpack.c.l.b16 %v356
    %v394 = vunpack.c.l.b16 %v357
    %v395 = vunpack.c.l.b16 %v358
    %v396 = vunpack.c.l.b16 %v359
    %v397 = vunpack.c.l.b16 %v360
    %v398 = vunpack.c.l.b16 %v361
    %v399 = vunpack.c.l.b16 %v362
    %v400 = vunpack.c.l.b16 %v363
    %v401 = vunpack.c.l.b16 %v364
    %v402 = vunpack.c.l.b16 %v365
    %v403 = vunpack.c.l.b16 %v366
    %v404 = vunpack.c.l.b16 %v367
    %v405 = vunpack.c.l.b16 %v368
    %v406 = vunpack.c.l.b16 %v369
    %v407 = vunpack.c.l.b16 %v370
    %v408 = vpack.c.b16 %v393, %v392
    %v409 = vpack.c.b16 %v395, %v394
    %v410 = vpack.c.b16 %v397, %v396
    %v411 = vpack.c.b16 %v399, %v398
    %v412 = vpack.c.b16 %v401, %v400
    %v413 = vpack.c.b16 %v403, %v402
    %v414 = vpack.c.b16 %v405, %v404
    %v415 = vpack.c.b16 %v407, %v406
    %424 = vmatprep.subr.bf16.mxu0 0
    %425 = vmatpush1.bf16.msra.mxu0 %v415
    %426 = vmatprep.subr.bf16.mxu0 0
    %427 = vmatpush1.bf16.msra.mxu0 %v414
    %428 = vmatprep.subr.bf16.mxu0 0
    %429 = vmatpush1.bf16.msra.mxu0 %v413
    %430 = vmatprep.subr.bf16.mxu0 0
    %431 = vmatpush1.bf16.msra.mxu0 %v412
    %432 = vmatprep.subr.bf16.mxu0 0
    %433 = vmatpush1.bf16.msra.mxu0 %v411
    %434 = vmatprep.subr.bf16.mxu0 0
    %435 = vmatpush1.bf16.msra.mxu0 %v410
    %436 = vmatprep.subr.bf16.mxu0 0
    %437 = vmatpush1.bf16.msra.mxu0 %v409
    %438 = vmatprep.subr.bf16.mxu0 0
    %439 = vmatpush1.bf16.msra.mxu0 %v408
    %440 = vmatprep.subr.bf16.mxu0 0
    %441 = vmatpush2.bf16.msra.mxu0 0
    %442 = vmatprep.subr.bf16.mxu0 0
    %443 = vmatpush2.bf16.msra.mxu0 0
    %444 = vmatprep.subr.bf16.mxu0 0
    %445 = vmatpush2.bf16.msra.mxu0 0
    %446 = vmatprep.subr.bf16.mxu0 0
    %447 = vmatpush2.bf16.msra.mxu0 0
    %448 = vmatprep.subr.bf16.mxu0 0
    %449 = vmatpush2.bf16.msra.mxu0 0
    %450 = vmatprep.subr.bf16.mxu0 0
    %451 = vmatpush2.bf16.msra.mxu0 0
    %452 = vmatprep.subr.bf16.mxu0 0
    %453 = vmatpush2.bf16.msra.mxu0 0
    %454 = vmatprep.subr.bf16.mxu0 0
    %455 = vmatpush2.bf16.msra.mxu0 0
    %456 = vmatprep.mubr.bf16.mxu0 0
    %457 = vmatmul.mubr.bf16.gmra.mxu0 %v371
    %v458 = vpop.f32.mrf.mxu0
    %v459 = vadd.f32 %v375, %v458
    %v460 = vpop.f32.mrf.mxu0
    %v461 = vpop.f32.mrf.mxu0
    %v462 = vadd.f32 %v375, %v461
    %v463 = vpop.f32.mrf.mxu0
    %464 = vdwg.mxu0
    %465 = vadd.xlane.f32.xlu0 %v459
    %v466 = vpop.xlane.xlu0 %465
    %467 = vadd.xlane.f32.xlu0 %v462
    %v468 = vpop.xlane.xlu0 %467
    %v469 = vmul.f32 %v459, %v459
    %v470 = vmul.f32 %v462, %v462
    %471 = vadd.xlane.f32.xlu0 %v469
    %v472 = vpop.xlane.xlu0 %471
    %473 = vadd.xlane.f32.xlu0 %v470
    %v474 = vpop.xlane.xlu0 %473
    %v475 = vmul.f32 %v466, 0.03125
    %v476 = vmul.f32 %v468, 0.03125
    %v477 = vmul.f32 %v472, 0.03125
    %v478 = vmul.f32 %v474, 0.03125
    %v479 = vmul.f32 %v475, %v475
    %v480 = vmul.f32 %v476, %v476
    %v481 = vsub.f32 %v477, %v479
    %v482 = vsub.f32 %v478, %v480
    %v483 = vsub.f32 %v459, %v475
    %v484 = vsub.f32 %v462, %v476
    %v485 = vadd.f32 %v481, 1e-05
    %v486 = vadd.f32 %v482, 1e-05
    %v487 = vrsqrt.pop %v485
    %v488 = vrsqrt.pop %v486
    %v489 = vlaneseq
    %v490 = vshrl.u32 %v489, 7
    %v491 = vsub.s32 2, %v490
    %v492 = vrot.slane %v45, %v491
    %v493 = vmul.f32 %v487, %v492
    %v494 = vmul.f32 %v488, %v492
    %v495 = vmul.f32 %v483, %v493
    %v496 = vmul.f32 %v484, %v494
    %v497 = vlaneseq
    %v498 = vshrl.u32 %v497, 7
    %v499 = vsub.s32 3, %v498
    %v500 = vrot.slane %v45, %v499
    %v501 = vadd.f32 %v495, %v500
    %v502 = vadd.f32 %v496, %v500
    %v503 = vmax.f32 %v501, 0.0
    %v504 = vmax.f32 %v502, 0.0
    %s505 = scalar_lea.vmem [#allocation2], 192
    %v506 = vld [vmem:[%s505] sm:$0xf]
    %v507 = vld [vmem:[%s505 + $0x4] sm:$0xf]
    %v508 = vld [vmem:[%s505 + $0x8] sm:$0xf]
    %v509 = vld [vmem:[%s505 + $0xc] sm:$0xf]
    %v510 = vld [vmem:[%s505 + $0x10] sm:$0xf]
    %v511 = vld [vmem:[%s505 + $0x14] sm:$0xf]
    %v512 = vld [vmem:[%s505 + $0x18] sm:$0xf]
    %v513 = vld [vmem:[%s505 + $0x1c] sm:$0xf]
    %v514 = vld [vmem:[%s505 + $0x20] sm:$0xf]
    %v515 = vld [vmem:[%s505 + $0x24] sm:$0xf]
    %v516 = vld [vmem:[%s505 + $0x28] sm:$0xf]
    %v517 = vld [vmem:[%s505 + $0x2c] sm:$0xf]
    %v518 = vld [vmem:[%s505 + $0x30] sm:$0xf]
    %v519 = vld [vmem:[%s505 + $0x34] sm:$0xf]
    %v520 = vld [vmem:[%s505 + $0x38] sm:$0xf]
    %v521 = vld [vmem:[%s505 + $0x3c] sm:$0xf]
    %v522 = vpack.c.bf16 %v504, %v503
    %v523 = vlaneseq
    %v524 = vshrl.u32 %v523, 7
    %v525 = vsub.s32 3, %v524
    %v526 = vrot.slane %v44, %v525
    %v543 = vunpack.c.l.b16 %v506
    %v544 = vunpack.c.l.b16 %v507
    %v545 = vunpack.c.l.b16 %v508
    %v546 = vunpack.c.l.b16 %v509
    %v547 = vunpack.c.l.b16 %v510
    %v548 = vunpack.c.l.b16 %v511
    %v549 = vunpack.c.l.b16 %v512
    %v550 = vunpack.c.l.b16 %v513
    %v551 = vunpack.c.l.b16 %v514
    %v552 = vunpack.c.l.b16 %v515
    %v553 = vunpack.c.l.b16 %v516
    %v554 = vunpack.c.l.b16 %v517
    %v555 = vunpack.c.l.b16 %v518
    %v556 = vunpack.c.l.b16 %v519
    %v557 = vunpack.c.l.b16 %v520
    %v558 = vunpack.c.l.b16 %v521
    %v559 = vpack.c.b16 %v544, %v543
    %v560 = vpack.c.b16 %v546, %v545
    %v561 = vpack.c.b16 %v548, %v547
    %v562 = vpack.c.b16 %v550, %v549
    %v563 = vpack.c.b16 %v552, %v551
    %v564 = vpack.c.b16 %v554, %v553
    %v565 = vpack.c.b16 %v556, %v555
    %v566 = vpack.c.b16 %v558, %v557
    %575 = vmatprep.subr.bf16.mxu0 0
    %576 = vmatpush1.bf16.msra.mxu0 %v566
    %577 = vmatprep.subr.bf16.mxu0 0
    %578 = vmatpush1.bf16.msra.mxu0 %v565
    %579 = vmatprep.subr.bf16.mxu0 0
    %580 = vmatpush1.bf16.msra.mxu0 %v564
    %581 = vmatprep.subr.bf16.mxu0 0
    %582 = vmatpush1.bf16.msra.mxu0 %v563
    %583 = vmatprep.subr.bf16.mxu0 0
    %584 = vmatpush1.bf16.msra.mxu0 %v562
    %585 = vmatprep.subr.bf16.mxu0 0
    %586 = vmatpush1.bf16.msra.mxu0 %v561
    %587 = vmatprep.subr.bf16.mxu0 0
    %588 = vmatpush1.bf16.msra.mxu0 %v560
    %589 = vmatprep.subr.bf16.mxu0 0
    %590 = vmatpush1.bf16.msra.mxu0 %v559
    %591 = vmatprep.subr.bf16.mxu0 0
    %592 = vmatpush2.bf16.msra.mxu0 0
    %593 = vmatprep.subr.bf16.mxu0 0
    %594 = vmatpush2.bf16.msra.mxu0 0
    %595 = vmatprep.subr.bf16.mxu0 0
    %596 = vmatpush2.bf16.msra.mxu0 0
    %597 = vmatprep.subr.bf16.mxu0 0
    %598 = vmatpush2.bf16.msra.mxu0 0
    %599 = vmatprep.subr.bf16.mxu0 0
    %600 = vmatpush2.bf16.msra.mxu0 0
    %601 = vmatprep.subr.bf16.mxu0 0
    %602 = vmatpush2.bf16.msra.mxu0 0
    %603 = vmatprep.subr.bf16.mxu0 0
    %604 = vmatpush2.bf16.msra.mxu0 0
    %605 = vmatprep.subr.bf16.mxu0 0
    %606 = vmatpush2.bf16.msra.mxu0 0
    %607 = vmatprep.mubr.bf16.mxu0 0
    %608 = vmatmul.mubr.bf16.gmra.mxu0 %v522
    %v609 = vpop.f32.mrf.mxu0
    %v610 = vadd.f32 %v526, %v609
    %v611 = vpop.f32.mrf.mxu0
    %v612 = vpop.f32.mrf.mxu0
    %v613 = vadd.f32 %v526, %v612
    %v614 = vpop.f32.mrf.mxu0
    %615 = vdwg.mxu0
    %616 = vadd.xlane.f32.xlu0 %v610
    %v617 = vpop.xlane.xlu0 %616
    %618 = vadd.xlane.f32.xlu0 %v613
    %v619 = vpop.xlane.xlu0 %618
    %v620 = vmul.f32 %v610, %v610
    %v621 = vmul.f32 %v613, %v613
    %622 = vadd.xlane.f32.xlu0 %v620
    %v623 = vpop.xlane.xlu0 %622
    %624 = vadd.xlane.f32.xlu0 %v621
    %v625 = vpop.xlane.xlu0 %624
    %v626 = vmul.f32 %v617, 0.03125
    %v627 = vmul.f32 %v619, 0.03125
    %v628 = vmul.f32 %v623, 0.03125
    %v629 = vmul.f32 %v625, 0.03125
    %v630 = vmul.f32 %v626, %v626
    %v631 = vmul.f32 %v627, %v627
    %v632 = vsub.f32 %v628, %v630
    %v633 = vsub.f32 %v629, %v631
    %v634 = vsub.f32 %v610, %v626
    %v635 = vsub.f32 %v613, %v627
    %v636 = vadd.f32 %v632, 1e-05
    %v637 = vadd.f32 %v633, 1e-05
    %v638 = vrsqrt.pop %v636
    %v639 = vrsqrt.pop %v637
    %v640 = vlaneseq
    %v641 = vshrl.u32 %v640, 7
    %v642 = vsub.s32 4, %v641
    %v643 = vrot.slane %v45, %v642
    %v644 = vmul.f32 %v638, %v643
    %v645 = vmul.f32 %v639, %v643
    %v646 = vmul.f32 %v634, %v644
    %v647 = vmul.f32 %v635, %v645
    %v648 = vlaneseq
    %v649 = vshrl.u32 %v648, 7
    %v650 = vsub.s32 5, %v649
    %v651 = vrot.slane %v45, %v650
    %v652 = vadd.f32 %v646, %v651
    %v653 = vadd.f32 %v647, %v651
    %v654 = vmax.f32 %v652, 0.0
    %v655 = vmax.f32 %v653, 0.0
    %s656 = scalar_lea.vmem [#allocation2], 256
    %v657 = vld [vmem:[%s656] sm:$0xf]
    %v658 = vld [vmem:[%s656 + $0x4] sm:$0xf]
    %v659 = vld [vmem:[%s656 + $0x8] sm:$0xf]
    %v660 = vld [vmem:[%s656 + $0xc] sm:$0xf]
    %v661 = vld [vmem:[%s656 + $0x10] sm:$0xf]
    %v662 = vld [vmem:[%s656 + $0x14] sm:$0xf]
    %v663 = vld [vmem:[%s656 + $0x18] sm:$0xf]
    %v664 = vld [vmem:[%s656 + $0x1c] sm:$0xf]
    %v665 = vld [vmem:[%s656 + $0x20] sm:$0xf]
    %v666 = vld [vmem:[%s656 + $0x24] sm:$0xf]
    %v667 = vld [vmem:[%s656 + $0x28] sm:$0xf]
    %v668 = vld [vmem:[%s656 + $0x2c] sm:$0xf]
    %v669 = vld [vmem:[%s656 + $0x30] sm:$0xf]
    %v670 = vld [vmem:[%s656 + $0x34] sm:$0xf]
    %v671 = vld [vmem:[%s656 + $0x38] sm:$0xf]
    %v672 = vld [vmem:[%s656 + $0x3c] sm:$0xf]
    %v673 = vpack.c.bf16 %v655, %v654
    %v674 = vlaneseq
    %v675 = vshrl.u32 %v674, 7
    %v676 = vsub.s32 4, %v675
    %v677 = vrot.slane %v44, %v676
    %v694 = vunpack.c.l.b16 %v657
    %v695 = vunpack.c.l.b16 %v658
    %v696 = vunpack.c.l.b16 %v659
    %v697 = vunpack.c.l.b16 %v660
    %v698 = vunpack.c.l.b16 %v661
    %v699 = vunpack.c.l.b16 %v662
    %v700 = vunpack.c.l.b16 %v663
    %v701 = vunpack.c.l.b16 %v664
    %v702 = vunpack.c.l.b16 %v665
    %v703 = vunpack.c.l.b16 %v666
    %v704 = vunpack.c.l.b16 %v667
    %v705 = vunpack.c.l.b16 %v668
    %v706 = vunpack.c.l.b16 %v669
    %v707 = vunpack.c.l.b16 %v670
    %v708 = vunpack.c.l.b16 %v671
    %v709 = vunpack.c.l.b16 %v672
    %v710 = vpack.c.b16 %v695, %v694
    %v711 = vpack.c.b16 %v697, %v696
    %v712 = vpack.c.b16 %v699, %v698
    %v713 = vpack.c.b16 %v701, %v700
    %v714 = vpack.c.b16 %v703, %v702
    %v715 = vpack.c.b16 %v705, %v704
    %v716 = vpack.c.b16 %v707, %v706
    %v717 = vpack.c.b16 %v709, %v708
    %726 = vmatprep.subr.bf16.mxu0 0
    %727 = vmatpush1.bf16.msra.mxu0 %v717
    %728 = vmatprep.subr.bf16.mxu0 0
    %729 = vmatpush1.bf16.msra.mxu0 %v716
    %730 = vmatprep.subr.bf16.mxu0 0
    %731 = vmatpush1.bf16.msra.mxu0 %v715
    %732 = vmatprep.subr.bf16.mxu0 0
    %733 = vmatpush1.bf16.msra.mxu0 %v714
    %734 = vmatprep.subr.bf16.mxu0 0
    %735 = vmatpush1.bf16.msra.mxu0 %v713
    %736 = vmatprep.subr.bf16.mxu0 0
    %737 = vmatpush1.bf16.msra.mxu0 %v712
    %738 = vmatprep.subr.bf16.mxu0 0
    %739 = vmatpush1.bf16.msra.mxu0 %v711
    %740 = vmatprep.subr.bf16.mxu0 0
    %741 = vmatpush1.bf16.msra.mxu0 %v710
    %742 = vmatprep.subr.bf16.mxu0 0
    %743 = vmatpush2.bf16.msra.mxu0 0
    %744 = vmatprep.subr.bf16.mxu0 0
    %745 = vmatpush2.bf16.msra.mxu0 0
    %746 = vmatprep.subr.bf16.mxu0 0
    %747 = vmatpush2.bf16.msra.mxu0 0
    %748 = vmatprep.subr.bf16.mxu0 0
    %749 = vmatpush2.bf16.msra.mxu0 0
    %750 = vmatprep.subr.bf16.mxu0 0
    %751 = vmatpush2.bf16.msra.mxu0 0
    %752 = vmatprep.subr.bf16.mxu0 0
    %753 = vmatpush2.bf16.msra.mxu0 0
    %754 = vmatprep.subr.bf16.mxu0 0
    %755 = vmatpush2.bf16.msra.mxu0 0
    %756 = vmatprep.subr.bf16.mxu0 0
    %757 = vmatpush2.bf16.msra.mxu0 0
    %758 = vmatprep.mubr.bf16.mxu0 0
    %759 = vmatmul.mubr.bf16.gmra.mxu0 %v673
    %v760 = vpop.f32.mrf.mxu0
    %v761 = vadd.f32 %v677, %v760
    %v762 = vpop.f32.mrf.mxu0
    %v763 = vpop.f32.mrf.mxu0
    %v764 = vadd.f32 %v677, %v763
    %v765 = vpop.f32.mrf.mxu0
    %766 = vdwg.mxu0
    %767 = vadd.xlane.f32.xlu0 %v761
    %v768 = vpop.xlane.xlu0 %767
    %769 = vadd.xlane.f32.xlu0 %v764
    %v770 = vpop.xlane.xlu0 %769
    %v771 = vmul.f32 %v761, %v761
    %v772 = vmul.f32 %v764, %v764
    %773 = vadd.xlane.f32.xlu0 %v771
    %v774 = vpop.xlane.xlu0 %773
    %775 = vadd.xlane.f32.xlu0 %v772
    %v776 = vpop.xlane.xlu0 %775
    %v777 = vmul.f32 %v768, 0.03125
    %v778 = vmul.f32 %v770, 0.03125
    %v779 = vmul.f32 %v774, 0.03125
    %v780 = vmul.f32 %v776, 0.03125
    %v781 = vmul.f32 %v777, %v777
    %v782 = vmul.f32 %v778, %v778
    %v783 = vsub.f32 %v779, %v781
    %v784 = vsub.f32 %v780, %v782
    %v785 = vsub.f32 %v761, %v777
    %v786 = vsub.f32 %v764, %v778
    %v787 = vadd.f32 %v783, 1e-05
    %v788 = vadd.f32 %v784, 1e-05
    %v789 = vrsqrt.pop %v787
    %v790 = vrsqrt.pop %v788
    %v791 = vlaneseq
    %v792 = vshrl.u32 %v791, 7
    %v793 = vsub.s32 6, %v792
    %v794 = vrot.slane %v45, %v793
    %v795 = vmul.f32 %v789, %v794
    %v796 = vmul.f32 %v790, %v794
    %v797 = vmul.f32 %v785, %v795
    %v798 = vmul.f32 %v786, %v796
    %v799 = vlaneseq
    %v800 = vshrl.u32 %v799, 7
    %v801 = vsub.s32 7, %v800
    %v802 = vrot.slane %v45, %v801
    %v803 = vadd.f32 %v797, %v802
    %v804 = vadd.f32 %v798, %v802
    %v805 = vmax.f32 %v803, 0.0
    %v806 = vmax.f32 %v804, 0.0
    %s807 = scalar_lea.vmem [#allocation2], 320
    %v808 = vld [vmem:[%s807] sm:$0xf]
    %v809 = vld [vmem:[%s807 + $0x4] sm:$0xf]
    %v810 = vld [vmem:[%s807 + $0x8] sm:$0xf]
    %v811 = vld [vmem:[%s807 + $0xc] sm:$0xf]
    %v812 = vld [vmem:[%s807 + $0x10] sm:$0xf]
    %v813 = vld [vmem:[%s807 + $0x14] sm:$0xf]
    %v814 = vld [vmem:[%s807 + $0x18] sm:$0xf]
    %v815 = vld [vmem:[%s807 + $0x1c] sm:$0xf]
    %v816 = vld [vmem:[%s807 + $0x20] sm:$0xf]
    %v817 = vld [vmem:[%s807 + $0x24] sm:$0xf]
    %v818 = vld [vmem:[%s807 + $0x28] sm:$0xf]
    %v819 = vld [vmem:[%s807 + $0x2c] sm:$0xf]
    %v820 = vld [vmem:[%s807 + $0x30] sm:$0xf]
    %v821 = vld [vmem:[%s807 + $0x34] sm:$0xf]
    %v822 = vld [vmem:[%s807 + $0x38] sm:$0xf]
    %v823 = vld [vmem:[%s807 + $0x3c] sm:$0xf]
    %v824 = vpack.c.bf16 %v806, %v805
    %v825 = vlaneseq
    %v826 = vshrl.u32 %v825, 7
    %v827 = vsub.s32 5, %v826
    %v828 = vrot.slane %v44, %v827
    %v845 = vunpack.c.l.b16 %v808
    %v846 = vunpack.c.l.b16 %v809
    %v847 = vunpack.c.l.b16 %v810
    %v848 = vunpack.c.l.b16 %v811
    %v849 = vunpack.c.l.b16 %v812
    %v850 = vunpack.c.l.b16 %v813
    %v851 = vunpack.c.l.b16 %v814
    %v852 = vunpack.c.l.b16 %v815
    %v853 = vunpack.c.l.b16 %v816
    %v854 = vunpack.c.l.b16 %v817
    %v855 = vunpack.c.l.b16 %v818
    %v856 = vunpack.c.l.b16 %v819
    %v857 = vunpack.c.l.b16 %v820
    %v858 = vunpack.c.l.b16 %v821
    %v859 = vunpack.c.l.b16 %v822
    %v860 = vunpack.c.l.b16 %v823
    %v861 = vpack.c.b16 %v846, %v845
    %v862 = vpack.c.b16 %v848, %v847
    %v863 = vpack.c.b16 %v850, %v849
    %v864 = vpack.c.b16 %v852, %v851
    %v865 = vpack.c.b16 %v854, %v853
    %v866 = vpack.c.b16 %v856, %v855
    %v867 = vpack.c.b16 %v858, %v857
    %v868 = vpack.c.b16 %v860, %v859
    %877 = vmatprep.subr.bf16.mxu0 0
    %878 = vmatpush1.bf16.msra.mxu0 %v868
    %879 = vmatprep.subr.bf16.mxu0 0
    %880 = vmatpush1.bf16.msra.mxu0 %v867
    %881 = vmatprep.subr.bf16.mxu0 0
    %882 = vmatpush1.bf16.msra.mxu0 %v866
    %883 = vmatprep.subr.bf16.mxu0 0
    %884 = vmatpush1.bf16.msra.mxu0 %v865
    %885 = vmatprep.subr.bf16.mxu0 0
    %886 = vmatpush1.bf16.msra.mxu0 %v864
    %887 = vmatprep.subr.bf16.mxu0 0
    %888 = vmatpush1.bf16.msra.mxu0 %v863
    %889 = vmatprep.subr.bf16.mxu0 0
    %890 = vmatpush1.bf16.msra.mxu0 %v862
    %891 = vmatprep.subr.bf16.mxu0 0
    %892 = vmatpush1.bf16.msra.mxu0 %v861
    %893 = vmatprep.subr.bf16.mxu0 0
    %894 = vmatpush2.bf16.msra.mxu0 0
    %895 = vmatprep.subr.bf16.mxu0 0
    %896 = vmatpush2.bf16.msra.mxu0 0
    %897 = vmatprep.subr.bf16.mxu0 0
    %898 = vmatpush2.bf16.msra.mxu0 0
    %899 = vmatprep.subr.bf16.mxu0 0
    %900 = vmatpush2.bf16.msra.mxu0 0
    %901 = vmatprep.subr.bf16.mxu0 0
    %902 = vmatpush2.bf16.msra.mxu0 0
    %903 = vmatprep.subr.bf16.mxu0 0
    %904 = vmatpush2.bf16.msra.mxu0 0
    %905 = vmatprep.subr.bf16.mxu0 0
    %906 = vmatpush2.bf16.msra.mxu0 0
    %907 = vmatprep.subr.bf16.mxu0 0
    %908 = vmatpush2.bf16.msra.mxu0 0
    %909 = vmatprep.mubr.bf16.mxu0 0
    %910 = vmatmul.mubr.bf16.gmra.mxu0 %v824
    %v911 = vpop.f32.mrf.mxu0
    %v912 = vadd.f32 %v828, %v911
    %v913 = vpop.f32.mrf.mxu0
    %v914 = vpop.f32.mrf.mxu0
    %v915 = vadd.f32 %v828, %v914
    %v916 = vpop.f32.mrf.mxu0
    %917 = vdwg.mxu0
    %v918 = vpack.c.bf16 %v915, %v912
    %v920 = vunpack.c.l.b16 %v918
    %v921 = vunpack.c.h.b16 %v918
    %v922 = vpack.c.b16 %v920, %v920
    %v923 = vpack.c.b16 %v921, %v921
    %926 = vst [vmem:[#allocation7] sm:$0xf] %v922
    %927 = vst [vmem:[#allocation7 + $0x4] sm:$0xf] %v923
    // Predicated region
    $region22: #{tpu_custom_call.1} parent=1 // pred_check
      _
    $region23: #{tpu_custom_call.1} parent=1 // pred_check_branch
      %929 = sbr.rel (0) target = $region25
    $region24: #{tpu_custom_call.1} parent=1 // pred_region
      %s931 = ssub.s32 128, 128
      %932 = vsyncadd [#allocation4], %s931
      %s933 = sshll.u32 [#allocation7], 4
      %s934 = int_to_ptr.vmem [resolvable:$true] %s933
      %939 = dma.vmem_to_hbm [thread:$0]  %s934, 128, %s3, [#allocation4], 64, 64, 4
    $region25: #{tpu_custom_call.1} parent=1 // pred_fallthru
      _
    // Predicated region
    $region26: #{tpu_custom_call.1} parent=1 // pred_check
      _
    $region27: #{tpu_custom_call.1} parent=1 // pred_check_branch
      %941 = sbr.rel (0) target = $region29
    $region28: #{tpu_custom_call.1} parent=1 // pred_region
      %942 = dma.done [#allocation4], 128
    $region29: #{tpu_custom_call.1} parent=1 // pred_fallthru
      _
    %943 = vsyncpa [#allocation3], 1
    %944 = vsyncpa [#allocation6], 1
    %945 = vsyncpa [#allocation4], 1

</llo_original>
